<compile_context>
chip_gen: v7x
topology: tpu7x:2x2x1
jax: 0.10.0
libtpu: 0.0.40
codegen_flags: <defaults>
</compile_context>

<pallas_src>
import jax
import jax.numpy as jnp
from jax.experimental import pallas as pl
from jax.experimental.pallas import tpu as pltpu

_LANE = 128
# Below this element count a single fused XLA elementwise op is strictly better
# than paying kernel-launch + pipeline-prime cost for a 1-2 block grid.
_MIN_PALLAS_ELEMS = 1 << 16  # 65536


def _dispact_kernel(x_ref, o_ref):
    # Single upcast to f32 / single downcast on store: matches PyTorch's f32
    # softplus math for low-precision inputs.
    x = x_ref[...].astype(jnp.float32)
    # F.softplus(x) with beta=1, threshold=20:
    #   softplus(x) = x                if x > 20
    #               = log1p(exp(x))    otherwise
    # The jnp.minimum guard keeps exp() finite in the discarded where-branch.
    sp = jnp.where(x > 20.0, x, jnp.log1p(jnp.exp(jnp.minimum(x, 20.0))))
    # torch.clamp(sp, min=0.0001, max=10000.0)
    o_ref[...] = jnp.clip(sp, 1e-4, 1e4).astype(o_ref.dtype)


def _dispact_jax(x):
    """Plain-JAX reference / fallback with identical semantics (f32 compute)."""
    xf = x.astype(jnp.float32)
    sp = jnp.where(xf > 20.0, xf, jnp.log1p(jnp.exp(jnp.minimum(xf, 20.0))))
    return jnp.clip(sp, 1e-4, 1e4).astype(x.dtype)


def _round_up(a, b):
    return ((a + b - 1) // b) * b


def _target_buffer_bytes():
    """Per-buffer DMA block target, generation-aware but v7x-safe by default.

    ~8 MiB per buffer => 4 pipelined buffers (in + out, double-buffered) use
    ~32 MiB, which fits comfortably inside the smallest physical VMEM
    (v7x: 64 MiB) while keeping the fixed ~0.35 us per-step overhead to a few
    percent of step time on every generation's HBM bandwidth.
    """
    try:
        vmem = pltpu.get_tpu_info().vmem_capacity_bytes
    except Exception:
        vmem = 64 << 20  # conservative: assume v7x-sized VMEM
    return max(2 << 20, min(8 << 20, vmem // 8))


def dispact(x, *, donate=False):
    """Apply DispAct forward to an arbitrarily-shaped float array (e.g. NCHW).

    Set donate=True only when the caller donates x at the jit boundary;
    it aliases the output onto the input buffer (no extra HBM allocation).
    """
    orig_shape = x.shape
    n = x.size
    if n == 0:
        return x

    # Small or ragged sizes: one fused XLA elementwise pass (already at the
    # HBM roofline for a pure elementwise op).  This removes the previous
    # jnp.pad + trailing-slice extra HBM passes on ragged sizes and avoids
    # kernel-launch / pipeline-prime cost dominating tiny decoder outputs.
    if (n % _LANE != 0) or (n < _MIN_PALLAS_ELEMS):
        return _dispact_jax(x)

    # Lane-dense (rows, 128) slab via a pure reshape (no copy, no padding).
    rows = n // _LANE
    x2d = jnp.ravel(x).reshape(rows, _LANE)

    itemsize = jnp.dtype(x.dtype).itemsize
    preferred_rows = _target_buffer_bytes() // (_LANE * itemsize)
    # Multiple of 32 -> legal packed sublane tile for f32 / bf16 / int8 alike.
    preferred_rows = max(256, (preferred_rows // 32) * 32)

    # Guarantee >= 2 grid steps so dimension_semantics=("parallel",) can shard
    # across both v7x TensorCores, and balance the two blocks when rows lies
    # between 1x and 2x the preferred block size.  (rows >= 512 here because of
    # the _MIN_PALLAS_ELEMS gate, so block_rows >= 256 and <= rows.)
    block_rows = min(preferred_rows, _round_up(pl.cdiv(rows, 2), 32))
    grid = (pl.cdiv(rows, block_rows),)  # Pallas masks the partial last block.

    # 2 buffers (double-buffered) x 2 arrays (in + out) + slack, explicit so the
    # v5e 16 MiB default scoped-VMEM limit never trips and v7x stays well under
    # its 64 MiB physical VMEM.
    vmem_limit = int(4 * block_rows * _LANE * itemsize + (4 << 20))

    out2d = pl.pallas_call(
        _dispact_kernel,
        out_shape=jax.ShapeDtypeStruct((rows, _LANE), x.dtype),
        grid_spec=pltpu.PrefetchScalarGridSpec(
            num_scalar_prefetch=0,
            grid=grid,
            in_specs=[pl.BlockSpec((block_rows, _LANE), lambda i: (i, 0))],
            out_specs=pl.BlockSpec((block_rows, _LANE), lambda i: (i, 0)),
        ),
        compiler_params=pltpu.CompilerParams(
            dimension_semantics=("parallel",),   # megacore sharding on v7x
            vmem_limit_bytes=vmem_limit,
        ),
        input_output_aliases=({0: 0} if donate else {}),
    )(x2d)

    return out2d.reshape(orig_shape)


if __name__ == "__main__":
    key = jax.random.PRNGKey(0)
    k1, k2, k3, k4 = jax.random.split(key, 4)

    # 1) Small NCHW decoder-style activation -> fused-XLA small-input path.
    x_small = jax.random.normal(k1, (2, 4, 16, 16), dtype=jnp.float32) * 5.0
    y_small = jax.block_until_ready(dispact(x_small))
    assert y_small.shape == x_small.shape and y_small.dtype == x_small.dtype
    assert jnp.allclose(y_small, _dispact_jax(x_small), atol=1e-6, rtol=1e-6)
    assert bool(jnp.all(y_small >= 1e-4)) and bool(jnp.all(y_small <= 1e4))

    # 2) Larger lane-aligned activation -> Pallas path (grid of >= 2 blocks).
    x_big = jax.random.normal(k2, (2, 4, 128, 128), dtype=jnp.float32) * 5.0
    y_big = jax.block_until_ready(dispact(x_big))
    assert y_big.shape == x_big.shape and y_big.dtype == x_big.dtype
    assert jnp.allclose(y_big, _dispact_jax(x_big), atol=1e-6, rtol=1e-6)
    assert bool(jnp.all(y_big >= 1e-4)) and bool(jnp.all(y_big <= 1e4))

    # 3) Ragged element count -> fused-XLA fallback (no pad / slice passes).
    x_rag = jax.random.normal(k3, (2, 3, 5, 7), dtype=jnp.float32) * 5.0
    y_rag = jax.block_until_ready(dispact(x_rag))
    assert y_rag.shape == x_rag.shape and y_rag.dtype == x_rag.dtype
    assert jnp.allclose(y_rag, _dispact_jax(x_rag), atol=1e-6, rtol=1e-6)

    # 4) bf16 input through the Pallas path (f32 compute, bf16 store).
    x_bf16 = (jax.random.normal(k4, (2, 4, 128, 128), dtype=jnp.float32) * 5.0
              ).astype(jnp.bfloat16)
    y_bf16 = jax.block_until_ready(dispact(x_bf16))
    assert y_bf16.shape == x_bf16.shape and y_bf16.dtype == jnp.bfloat16
    assert jnp.allclose(y_bf16.astype(jnp.float32),
                        _dispact_jax(x_bf16).astype(jnp.float32),
                        atol=2e-2, rtol=2e-2)

    print("KERNEL_OK")
</pallas_src>

<mosaic_0001>
module attributes {stable_mosaic.version = 11 : i64} {
  func.func @_dispact_kernel(%arg0: i32, %arg1: memref<512x128xf32, #tpu.memory_space<vmem>>, %arg2: memref<512x128xf32, #tpu.memory_space<vmem>>) attributes {dimension_semantics = [#tpu.dimension_semantics<parallel>], iteration_bounds = array<i64: 2>, scalar_prefetch = 0 : i64, scratch_operands = 0 : i64, tpu.core_type = #tpu.core_type<tc>, window_params = [{transform_indices = @transform_0, window_bounds = array<i64: 512, 128>}, {transform_indices = @transform_1, window_bounds = array<i64: 512, 128>}]} {
    %c0 = arith.constant 0 : index
    %c0_0 = arith.constant 0 : index
    %0 = vector.load %arg1[%c0, %c0_0] : memref<512x128xf32, #tpu.memory_space<vmem>>, vector<512x128xf32>
    %cst = arith.constant 2.000000e+01 : f32
    %1 = vector.broadcast %cst : f32 to vector<512x128xf32>
    %2 = arith.cmpf ogt, %0, %1 : vector<512x128xf32>
    %cst_1 = arith.constant 2.000000e+01 : f32
    %3 = vector.broadcast %cst_1 : f32 to vector<512x128xf32>
    %4 = arith.minimumf %0, %3 : vector<512x128xf32>
    %5 = math.exp %4 : vector<512x128xf32>
    %6 = math.log1p %5 : vector<512x128xf32>
    %7 = arith.select %2, %0, %6 : vector<512x128xi1>, vector<512x128xf32>
    %cst_2 = arith.constant 9.99999974E-5 : f32
    %cst_3 = arith.constant 1.000000e+04 : f32
    %8 = vector.broadcast %cst_2 : f32 to vector<512x128xf32>
    %9 = arith.maximumf %8, %7 : vector<512x128xf32>
    %10 = vector.broadcast %cst_3 : f32 to vector<512x128xf32>
    %11 = arith.minimumf %10, %9 : vector<512x128xf32>
    %c0_4 = arith.constant 0 : index
    %c0_5 = arith.constant 0 : index
    %12 = vector.load %arg2[%c0_4, %c0_5] : memref<512x128xf32, #tpu.memory_space<vmem>>, vector<512x128xf32>
    tpu.vector_store %arg2[%c0_4, %c0_5], %11 {strides = array<i32>} : memref<512x128xf32, #tpu.memory_space<vmem>>, vector<512x128xf32>,
    return
  }
  func.func @transform_0(%arg0: i32) -> (i32, i32) {
    %c0_i32 = arith.constant 0 : i32
    %c0_i32_0 = arith.constant 0 : i32
    return %arg0, %c0_i32 : i32, i32
  }
  func.func @transform_1(%arg0: i32) -> (i32, i32) {
    %c0_i32 = arith.constant 0 : i32
    %c0_i32_0 = arith.constant 0 : i32
    return %arg0, %c0_i32 : i32, i32
  }
}

</mosaic_0001>

<llo_original>
// kernel: tpu_custom_call.1
$region0: #{tpu_custom_call.1}
  #allocation0 [shape = 'u32[]', space=smem, size = 0x4, offset = 0x4, fixed_abs, tag = 'smem constant byte address 0x4 - core index']
  #allocation1 [shape = 'u32[144,128]{1,0:T(1,128)}', space=vmem, size = 0x12000, scoped, tag = 'internal scratch']
  %s0 = inlined_call_operand.hbm [shape: f32[1024,128], index: 0, kind: input, shape index: {}]
  %s1 = inlined_call_operand.hbm [shape: f32[1024,128], index: 1, kind: output, shape index: {}]
  %s2 = sld [smem:[#allocation0]]
  $region41: #{tpu_custom_call.1} parent=0
    _
  %s4 = ssub.s32 1, %s2
  %s5 = scalar_select 0, %s4, %s2
  $region1: #{tpu_custom_call.1} parent=0
    #allocation2 [shape = 'u8[524288]{0}', space=vmem, size = 0x80000, scoped, tag = 'input window, operand 0']
    #allocation3 [shape = 's32[2]{0}', space=sflag, size = 0x8, scoped, tag = 'scoped memory for tpu_custom_call.1']
    #allocation4 [shape = 's32[2]{0}', space=sflag, size = 0x8, scoped, tag = 'scoped memory for tpu_custom_call.1']
    #allocation5 [shape = 'u8[524288]{0}', space=vmem, size = 0x80000, scoped, tag = 'output window, operand 0']
    %6 = vsyncpa [#allocation3], 0
    %s7 = scalar_lea.sflag [#allocation3], 1
    %8 = vsyncpa %s7, 0
    %9 = vsyncpa [#allocation4], 0
    %s10 = scalar_lea.sflag [#allocation4], 1
    %11 = vsyncpa %s10, 0
    loop: start=0, step=1, limit=4
    $region2: #{tpu_custom_call.1} parent=1 // loop_pre_header
      _
    $region3: #{tpu_custom_call.1} parent=1 // loop_header
      %s13 = sphi 0, %s17
      %p14 = scmp.ge.s32.totalorder %s13, 4
      %s23 = sphi 0, %s25
      %s26 = sphi 0, %s23
      %s27 = sphi 0, %s26
      %s43 = sphi 0, %s27
      %s49 = sphi 0, %s51
      %s52 = sphi 0, %s49
      %s53 = sphi 0, %s52
      %s69 = sphi 0, %s53
    $region4: #{tpu_custom_call.1} parent=1 // loop_header_branch
      %16 = sbr.rel (%p14) target = $region8
    $region5: #{tpu_custom_call.1} parent=1 // loop_body
      %s18 = ssub.s32 %s13, 1
      %s19 = ssub.s32 %s13, 2
      %s20 = sadd.s32 %s13, 1
      %s21 = ssub.s32 %s13, %s20
      %p22 = scmp.eq.s32.totalorder %s21, 0
      %s24 = sadd.s32 %s23, 1
      %s25 = scalar_select %p22, %s23, %s24
      %p28 = pneg %p22
      %p29 = scmp.eq.s32.totalorder %s13, 1
      %p30 = por %p28, %p29
      %p31 = scmp.ne.s32.totalorder %s23, %s26
      %p32 = scmp.eq.s32.totalorder %s13, 0
      %p33 = por %p31, %p32
      %p34 = scmp.ne.s32.totalorder %s23, %s26
      %p35 = scmp.eq.s32.totalorder %s18, 1
      %p36 = por %p34, %p35
      %p37 = scmp.ne.s32.totalorder %s26, %s27
      %p38 = scmp.eq.s32.totalorder %s18, 0
      %p39 = por %p37, %p38
      %p40 = scmp.ne.s32.totalorder %s26, %s27
      %p41 = scmp.eq.s32.totalorder %s19, 1
      %p42 = por %p40, %p41
      %p44 = scmp.ne.s32.totalorder %s27, %s43
      %p45 = scmp.eq.s32.totalorder %s19, 0
      %p46 = por %p44, %p45
      %s47 = ssub.s32 %s13, %s20
      %p48 = scmp.eq.s32.totalorder %s47, 0
      %s50 = sadd.s32 %s49, 1
      %s51 = scalar_select %p48, %s49, %s50
      %p54 = pneg %p48
      %p55 = scmp.eq.s32.totalorder %s13, 1
      %p56 = por %p54, %p55
      %p57 = scmp.ne.s32.totalorder %s49, %s52
      %p58 = scmp.eq.s32.totalorder %s13, 0
      %p59 = por %p57, %p58
      %p60 = scmp.ne.s32.totalorder %s49, %s52
      %p61 = scmp.eq.s32.totalorder %s18, 1
      %p62 = por %p60, %p61
      %p63 = scmp.ne.s32.totalorder %s52, %s53
      %p64 = scmp.eq.s32.totalorder %s18, 0
      %p65 = por %p63, %p64
      %p66 = scmp.ne.s32.totalorder %s52, %s53
      %p67 = scmp.eq.s32.totalorder %s19, 1
      %p68 = por %p66, %p67
      %p70 = scmp.ne.s32.totalorder %s53, %s69
      %p71 = scmp.eq.s32.totalorder %s19, 0
      %p72 = por %p70, %p71
      %p73 = scmp.le.s32.totalorder 1, %s13
      %p74 = scmp.lt.s32.totalorder %s13, 3
      %p75 = pnand %p73, %p74
      %p76 = pneg %p75
      // Predicated region
      $region9: #{tpu_custom_call.1} parent=5 // pred_check
        _
      $region10: #{tpu_custom_call.1} parent=5 // pred_check_branch
        %78 = sbr.rel (%p75) target = $region12
      $region11: #{tpu_custom_call.1} parent=5 // pred_region
        %s79 = ssub.s32 %s13, 1
      $region12: #{tpu_custom_call.1} parent=5 // pred_fallthru
        _
      %p80 = scmp.lt.s32.totalorder %s13, 2
      // Predicated region
      $region13: #{tpu_custom_call.1} parent=5 // pred_check
        %p81 = pneg %p80
      $region14: #{tpu_custom_call.1} parent=5 // pred_check_branch
        %83 = sbr.rel (%p81) target = $region16
      $region15: #{tpu_custom_call.1} parent=5 // pred_region
        // Predicated region
        $region17: #{tpu_custom_call.1} parent=15 // pred_check
          %p84 = pneg %p33
        $region18: #{tpu_custom_call.1} parent=15 // pred_check_branch
          %86 = sbr.rel (%p84) target = $region20
        $region19: #{tpu_custom_call.1} parent=15 // pred_region
          %s87 = sand.u32 %s23, 1
          %s88 = scalar_lea.sflag [#allocation3], %s87
          %s89 = sand.u32 %s23, 1
          %s90 = smul.addr %s89, 512
          %s91 = scalar_lea.vmem [#allocation2], %s90
          %s92 = smul.u32 64, %s13
          %s94 = ssub.s32 8192, 8192
          %95 = vsyncadd %s88, %s94
          %s96 = smul.addr %s92, 128
          %s97 = scalar_lea.hbm %s0, %s96
          %s98 = sshll.u32 %s91, 4
          %s99 = int_to_ptr.vmem [resolvable:$true] %s98
          %104 = dma.hbm_to_vmem [thread:$0]  %s97, 8192, %s99, %s88, 128, 128, 8
        $region20: #{tpu_custom_call.1} parent=15 // pred_fallthru
          _
      $region16: #{tpu_custom_call.1} parent=5 // pred_fallthru
        _
      %p105 = scmp.le.s32.totalorder 1, %s13
      %p106 = scmp.lt.s32.totalorder %s13, 3
      %p107 = pnand %p105, %p106
      %p108 = pneg %p107
      // Predicated region
      $region21: #{tpu_custom_call.1} parent=5 // pred_check
        _
      $region22: #{tpu_custom_call.1} parent=5 // pred_check_branch
        %110 = sbr.rel (%p107) target = $region24
      $region23: #{tpu_custom_call.1} parent=5 // pred_region
        %s111 = ssub.s32 %s13, 1
        %s112 = sand.u32 %s26, 1
        %s113 = scalar_lea.sflag [#allocation3], %s112
        %s114 = sand.u32 %s26, 1
        %s115 = smul.addr %s114, 512
        %s116 = scalar_lea.vmem [#allocation2], %s115
        // Predicated region
        $region25: #{tpu_custom_call.1} parent=23 // pred_check
          %p117 = pneg %p39
        $region26: #{tpu_custom_call.1} parent=23 // pred_check_branch
          %119 = sbr.rel (%p117) target = $region28
        $region27: #{tpu_custom_call.1} parent=23 // pred_region
          %120 = dma.done %s113, 8192
        $region28: #{tpu_custom_call.1} parent=23 // pred_fallthru
          _
        %s121 = sand.u32 %s26, 1
        %s122 = scalar_lea.sflag [#allocation3], %s121
        %s123 = sand.u32 %s26, 1
        %s124 = smul.addr %s123, 512
        %s125 = scalar_lea.vmem [#allocation2], %s124
        %p126 = pneg %p39
        %p127 = pneg %p36
        %p128 = pneg %p65
        %p129 = pneg %p62
        %s130 = sand.u32 %s52, 1
        %s131 = scalar_lea.sflag [#allocation4], %s130
        %s132 = sand.u32 %s52, 1
        %s133 = smul.addr %s132, 512
        %s134 = scalar_lea.vmem [#allocation5], %s133
        %s135 = smul.u32 64, %s18
        %s136 = smul.u32 64, %s18
        %v137 = vld [vmem:[%s116] sm:$0xff]
        %v138 = vld [vmem:[%s116 + $0x8] sm:$0xff]
        %v139 = vld [vmem:[%s116 + $0x10] sm:$0xff]
        %v140 = vld [vmem:[%s116 + $0x18] sm:$0xff]
        %v141 = vld [vmem:[%s116 + $0x20] sm:$0xff]
        %v142 = vld [vmem:[%s116 + $0x28] sm:$0xff]
        %v143 = vld [vmem:[%s116 + $0x30] sm:$0xff]
        %v144 = vld [vmem:[%s116 + $0x38] sm:$0xff]
        %v145 = vld [vmem:[%s116 + $0x40] sm:$0xff]
        %v146 = vld [vmem:[%s116 + $0x48] sm:$0xff]
        %v147 = vld [vmem:[%s116 + $0x50] sm:$0xff]
        %v148 = vld [vmem:[%s116 + $0x58] sm:$0xff]
        %v149 = vld [vmem:[%s116 + $0x60] sm:$0xff]
        %v150 = vld [vmem:[%s116 + $0x68] sm:$0xff]
        %v151 = vld [vmem:[%s116 + $0x70] sm:$0xff]
        %v152 = vld [vmem:[%s116 + $0x78] sm:$0xff]
        %v153 = vld [vmem:[%s116 + $0x80] sm:$0xff]
        %v154 = vld [vmem:[%s116 + $0x88] sm:$0xff]
        %v155 = vld [vmem:[%s116 + $0x90] sm:$0xff]
        %v156 = vld [vmem:[%s116 + $0x98] sm:$0xff]
        %v157 = vld [vmem:[%s116 + $0xa0] sm:$0xff]
        %v158 = vld [vmem:[%s116 + $0xa8] sm:$0xff]
        %v159 = vld [vmem:[%s116 + $0xb0] sm:$0xff]
        %v160 = vld [vmem:[%s116 + $0xb8] sm:$0xff]
        %v161 = vld [vmem:[%s116 + $0xc0] sm:$0xff]
        %v162 = vld [vmem:[%s116 + $0xc8] sm:$0xff]
        %v163 = vld [vmem:[%s116 + $0xd0] sm:$0xff]
        %v164 = vld [vmem:[%s116 + $0xd8] sm:$0xff]
        %v165 = vld [vmem:[%s116 + $0xe0] sm:$0xff]
        %v166 = vld [vmem:[%s116 + $0xe8] sm:$0xff]
        %v167 = vld [vmem:[%s116 + $0xf0] sm:$0xff]
        %v168 = vld [vmem:[%s116 + $0xf8] sm:$0xff]
        %v169 = vld [vmem:[%s116 + $0x100] sm:$0xff]
        %v170 = vld [vmem:[%s116 + $0x108] sm:$0xff]
        %v171 = vld [vmem:[%s116 + $0x110] sm:$0xff]
        %v172 = vld [vmem:[%s116 + $0x118] sm:$0xff]
        %v173 = vld [vmem:[%s116 + $0x120] sm:$0xff]
        %v174 = vld [vmem:[%s116 + $0x128] sm:$0xff]
        %v175 = vld [vmem:[%s116 + $0x130] sm:$0xff]
        %v176 = vld [vmem:[%s116 + $0x138] sm:$0xff]
        %v177 = vld [vmem:[%s116 + $0x140] sm:$0xff]
        %v178 = vld [vmem:[%s116 + $0x148] sm:$0xff]
        %v179 = vld [vmem:[%s116 + $0x150] sm:$0xff]
        %v180 = vld [vmem:[%s116 + $0x158] sm:$0xff]
        %v181 = vld [vmem:[%s116 + $0x160] sm:$0xff]
        %v182 = vld [vmem:[%s116 + $0x168] sm:$0xff]
        %v183 = vld [vmem:[%s116 + $0x170] sm:$0xff]
        %v184 = vld [vmem:[%s116 + $0x178] sm:$0xff]
        %v185 = vld [vmem:[%s116 + $0x180] sm:$0xff]
        %v186 = vld [vmem:[%s116 + $0x188] sm:$0xff]
        %v187 = vld [vmem:[%s116 + $0x190] sm:$0xff]
        %v188 = vld [vmem:[%s116 + $0x198] sm:$0xff]
        %v189 = vld [vmem:[%s116 + $0x1a0] sm:$0xff]
        %v190 = vld [vmem:[%s116 + $0x1a8] sm:$0xff]
        %v191 = vld [vmem:[%s116 + $0x1b0] sm:$0xff]
        %v192 = vld [vmem:[%s116 + $0x1b8] sm:$0xff]
        %v193 = vld [vmem:[%s116 + $0x1c0] sm:$0xff]
        %v194 = vld [vmem:[%s116 + $0x1c8] sm:$0xff]
        %v195 = vld [vmem:[%s116 + $0x1d0] sm:$0xff]
        %v196 = vld [vmem:[%s116 + $0x1d8] sm:$0xff]
        %v197 = vld [vmem:[%s116 + $0x1e0] sm:$0xff]
        %v198 = vld [vmem:[%s116 + $0x1e8] sm:$0xff]
        %v199 = vld [vmem:[%s116 + $0x1f0] sm:$0xff]
        %v200 = vld [vmem:[%s116 + $0x1f8] sm:$0xff]
        %vm201 = vcmp.gt.f32.partialorder %v137, 20.0
        %vm202 = vcmp.gt.f32.partialorder %v138, 20.0
        %vm203 = vcmp.gt.f32.partialorder %v139, 20.0
        %vm204 = vcmp.gt.f32.partialorder %v140, 20.0
        %vm205 = vcmp.gt.f32.partialorder %v141, 20.0
        %vm206 = vcmp.gt.f32.partialorder %v142, 20.0
        %vm207 = vcmp.gt.f32.partialorder %v143, 20.0
        %vm208 = vcmp.gt.f32.partialorder %v144, 20.0
        %vm209 = vcmp.gt.f32.partialorder %v145, 20.0
        %vm210 = vcmp.gt.f32.partialorder %v146, 20.0
        %vm211 = vcmp.gt.f32.partialorder %v147, 20.0
        %vm212 = vcmp.gt.f32.partialorder %v148, 20.0
        %vm213 = vcmp.gt.f32.partialorder %v149, 20.0
        %vm214 = vcmp.gt.f32.partialorder %v150, 20.0
        %vm215 = vcmp.gt.f32.partialorder %v151, 20.0
        %vm216 = vcmp.gt.f32.partialorder %v152, 20.0
        %vm217 = vcmp.gt.f32.partialorder %v153, 20.0
        %vm218 = vcmp.gt.f32.partialorder %v154, 20.0
        %vm219 = vcmp.gt.f32.partialorder %v155, 20.0
        %vm220 = vcmp.gt.f32.partialorder %v156, 20.0
        %vm221 = vcmp.gt.f32.partialorder %v157, 20.0
        %vm222 = vcmp.gt.f32.partialorder %v158, 20.0
        %vm223 = vcmp.gt.f32.partialorder %v159, 20.0
        %vm224 = vcmp.gt.f32.partialorder %v160, 20.0
        %vm225 = vcmp.gt.f32.partialorder %v161, 20.0
        %vm226 = vcmp.gt.f32.partialorder %v162, 20.0
        %vm227 = vcmp.gt.f32.partialorder %v163, 20.0
        %vm228 = vcmp.gt.f32.partialorder %v164, 20.0
        %vm229 = vcmp.gt.f32.partialorder %v165, 20.0
        %vm230 = vcmp.gt.f32.partialorder %v166, 20.0
        %vm231 = vcmp.gt.f32.partialorder %v167, 20.0
        %vm232 = vcmp.gt.f32.partialorder %v168, 20.0
        %vm233 = vcmp.gt.f32.partialorder %v169, 20.0
        %vm234 = vcmp.gt.f32.partialorder %v170, 20.0
        %vm235 = vcmp.gt.f32.partialorder %v171, 20.0
        %vm236 = vcmp.gt.f32.partialorder %v172, 20.0
        %vm237 = vcmp.gt.f32.partialorder %v173, 20.0
        %vm238 = vcmp.gt.f32.partialorder %v174, 20.0
        %vm239 = vcmp.gt.f32.partialorder %v175, 20.0
        %vm240 = vcmp.gt.f32.partialorder %v176, 20.0
        %vm241 = vcmp.gt.f32.partialorder %v177, 20.0
        %vm242 = vcmp.gt.f32.partialorder %v178, 20.0
        %vm243 = vcmp.gt.f32.partialorder %v179, 20.0
        %vm244 = vcmp.gt.f32.partialorder %v180, 20.0
        %vm245 = vcmp.gt.f32.partialorder %v181, 20.0
        %vm246 = vcmp.gt.f32.partialorder %v182, 20.0
        %vm247 = vcmp.gt.f32.partialorder %v183, 20.0
        %vm248 = vcmp.gt.f32.partialorder %v184, 20.0
        %vm249 = vcmp.gt.f32.partialorder %v185, 20.0
        %vm250 = vcmp.gt.f32.partialorder %v186, 20.0
        %vm251 = vcmp.gt.f32.partialorder %v187, 20.0
        %vm252 = vcmp.gt.f32.partialorder %v188, 20.0
        %vm253 = vcmp.gt.f32.partialorder %v189, 20.0
        %vm254 = vcmp.gt.f32.partialorder %v190, 20.0
        %vm255 = vcmp.gt.f32.partialorder %v191, 20.0
        %vm256 = vcmp.gt.f32.partialorder %v192, 20.0
        %vm257 = vcmp.gt.f32.partialorder %v193, 20.0
        %vm258 = vcmp.gt.f32.partialorder %v194, 20.0
        %vm259 = vcmp.gt.f32.partialorder %v195, 20.0
        %vm260 = vcmp.gt.f32.partialorder %v196, 20.0
        %vm261 = vcmp.gt.f32.partialorder %v197, 20.0
        %vm262 = vcmp.gt.f32.partialorder %v198, 20.0
        %vm263 = vcmp.gt.f32.partialorder %v199, 20.0
        %vm264 = vcmp.gt.f32.partialorder %v200, 20.0
        %v265 = vmin.f32 %v137, 20.0
        %v266 = vmin.f32 %v138, 20.0
        %v267 = vmin.f32 %v139, 20.0
        %v268 = vmin.f32 %v140, 20.0
        %v269 = vmin.f32 %v141, 20.0
        %v270 = vmin.f32 %v142, 20.0
        %v271 = vmin.f32 %v143, 20.0
        %v272 = vmin.f32 %v144, 20.0
        %v273 = vmin.f32 %v145, 20.0
        %v274 = vmin.f32 %v146, 20.0
        %v275 = vmin.f32 %v147, 20.0
        %v276 = vmin.f32 %v148, 20.0
        %v277 = vmin.f32 %v149, 20.0
        %v278 = vmin.f32 %v150, 20.0
        %v279 = vmin.f32 %v151, 20.0
        %v280 = vmin.f32 %v152, 20.0
        %v281 = vmin.f32 %v153, 20.0
        %v282 = vmin.f32 %v154, 20.0
        %v283 = vmin.f32 %v155, 20.0
        %v284 = vmin.f32 %v156, 20.0
        %v285 = vmin.f32 %v157, 20.0
        %v286 = vmin.f32 %v158, 20.0
        %v287 = vmin.f32 %v159, 20.0
        %v288 = vmin.f32 %v160, 20.0
        %v289 = vmin.f32 %v161, 20.0
        %v290 = vmin.f32 %v162, 20.0
        %v291 = vmin.f32 %v163, 20.0
        %v292 = vmin.f32 %v164, 20.0
        %v293 = vmin.f32 %v165, 20.0
        %v294 = vmin.f32 %v166, 20.0
        %v295 = vmin.f32 %v167, 20.0
        %v296 = vmin.f32 %v168, 20.0
        %v297 = vmin.f32 %v169, 20.0
        %v298 = vmin.f32 %v170, 20.0
        %v299 = vmin.f32 %v171, 20.0
        %v300 = vmin.f32 %v172, 20.0
        %v301 = vmin.f32 %v173, 20.0
        %v302 = vmin.f32 %v174, 20.0
        %v303 = vmin.f32 %v175, 20.0
        %v304 = vmin.f32 %v176, 20.0
        %v305 = vmin.f32 %v177, 20.0
        %v306 = vmin.f32 %v178, 20.0
        %v307 = vmin.f32 %v179, 20.0
        %v308 = vmin.f32 %v180, 20.0
        %v309 = vmin.f32 %v181, 20.0
        %v310 = vmin.f32 %v182, 20.0
        %v311 = vmin.f32 %v183, 20.0
        %v312 = vmin.f32 %v184, 20.0
        %v313 = vmin.f32 %v185, 20.0
        %v314 = vmin.f32 %v186, 20.0
        %v315 = vmin.f32 %v187, 20.0
        %v316 = vmin.f32 %v188, 20.0
        %v317 = vmin.f32 %v189, 20.0
        %v318 = vmin.f32 %v190, 20.0
        %v319 = vmin.f32 %v191, 20.0
        %v320 = vmin.f32 %v192, 20.0
        %v321 = vmin.f32 %v193, 20.0
        %v322 = vmin.f32 %v194, 20.0
        %v323 = vmin.f32 %v195, 20.0
        %v324 = vmin.f32 %v196, 20.0
        %v325 = vmin.f32 %v197, 20.0
        %v326 = vmin.f32 %v198, 20.0
        %v327 = vmin.f32 %v199, 20.0
        %v328 = vmin.f32 %v200, 20.0
        %v329 = vmul.f32 %v265, 1.442695
        %v330 = vpow.pop %v329
        %v331 = vmul.f32 %v266, 1.442695
        %v332 = vpow.pop %v331
        %v333 = vmul.f32 %v267, 1.442695
        %v334 = vpow.pop %v333
        %v335 = vmul.f32 %v268, 1.442695
        %v336 = vpow.pop %v335
        %v337 = vmul.f32 %v269, 1.442695
        %v338 = vpow.pop %v337
        %v339 = vmul.f32 %v270, 1.442695
        %v340 = vpow.pop %v339
        %v341 = vmul.f32 %v271, 1.442695
        %v342 = vpow.pop %v341
        %v343 = vmul.f32 %v272, 1.442695
        %v344 = vpow.pop %v343
        %v345 = vmul.f32 %v273, 1.442695
        %v346 = vpow.pop %v345
        %v347 = vmul.f32 %v274, 1.442695
        %v348 = vpow.pop %v347
        %v349 = vmul.f32 %v275, 1.442695
        %v350 = vpow.pop %v349
        %v351 = vmul.f32 %v276, 1.442695
        %v352 = vpow.pop %v351
        %v353 = vmul.f32 %v277, 1.442695
        %v354 = vpow.pop %v353
        %v355 = vmul.f32 %v278, 1.442695
        %v356 = vpow.pop %v355
        %v357 = vmul.f32 %v279, 1.442695
        %v358 = vpow.pop %v357
        %v359 = vmul.f32 %v280, 1.442695
        %v360 = vpow.pop %v359
        %v361 = vmul.f32 %v281, 1.442695
        %v362 = vpow.pop %v361
        %v363 = vmul.f32 %v282, 1.442695
        %v364 = vpow.pop %v363
        %v365 = vmul.f32 %v283, 1.442695
        %v366 = vpow.pop %v365
        %v367 = vmul.f32 %v284, 1.442695
        %v368 = vpow.pop %v367
        %v369 = vmul.f32 %v285, 1.442695
        %v370 = vpow.pop %v369
        %v371 = vmul.f32 %v286, 1.442695
        %v372 = vpow.pop %v371
        %v373 = vmul.f32 %v287, 1.442695
        %v374 = vpow.pop %v373
        %v375 = vmul.f32 %v288, 1.442695
        %v376 = vpow.pop %v375
        %v377 = vmul.f32 %v289, 1.442695
        %v378 = vpow.pop %v377
        %v379 = vmul.f32 %v290, 1.442695
        %v380 = vpow.pop %v379
        %v381 = vmul.f32 %v291, 1.442695
        %v382 = vpow.pop %v381
        %v383 = vmul.f32 %v292, 1.442695
        %v384 = vpow.pop %v383
        %v385 = vmul.f32 %v293, 1.442695
        %v386 = vpow.pop %v385
        %v387 = vmul.f32 %v294, 1.442695
        %v388 = vpow.pop %v387
        %v389 = vmul.f32 %v295, 1.442695
        %v390 = vpow.pop %v389
        %v391 = vmul.f32 %v296, 1.442695
        %v392 = vpow.pop %v391
        %v393 = vmul.f32 %v297, 1.442695
        %v394 = vpow.pop %v393
        %v395 = vmul.f32 %v298, 1.442695
        %v396 = vpow.pop %v395
        %v397 = vmul.f32 %v299, 1.442695
        %v398 = vpow.pop %v397
        %v399 = vmul.f32 %v300, 1.442695
        %v400 = vpow.pop %v399
        %v401 = vmul.f32 %v301, 1.442695
        %v402 = vpow.pop %v401
        %v403 = vmul.f32 %v302, 1.442695
        %v404 = vpow.pop %v403
        %v405 = vmul.f32 %v303, 1.442695
        %v406 = vpow.pop %v405
        %v407 = vmul.f32 %v304, 1.442695
        %v408 = vpow.pop %v407
        %v409 = vmul.f32 %v305, 1.442695
        %v410 = vpow.pop %v409
        %v411 = vmul.f32 %v306, 1.442695
        %v412 = vpow.pop %v411
        %v413 = vmul.f32 %v307, 1.442695
        %v414 = vpow.pop %v413
        %v415 = vmul.f32 %v308, 1.442695
        %v416 = vpow.pop %v415
        %v417 = vmul.f32 %v309, 1.442695
        %v418 = vpow.pop %v417
        %v419 = vmul.f32 %v310, 1.442695
        %v420 = vpow.pop %v419
        %v421 = vmul.f32 %v311, 1.442695
        %v422 = vpow.pop %v421
        %v423 = vmul.f32 %v312, 1.442695
        %v424 = vpow.pop %v423
        %v425 = vmul.f32 %v313, 1.442695
        %v426 = vpow.pop %v425
        %v427 = vmul.f32 %v314, 1.442695
        %v428 = vpow.pop %v427
        %v429 = vmul.f32 %v315, 1.442695
        %v430 = vpow.pop %v429
        %v431 = vmul.f32 %v316, 1.442695
        %v432 = vpow.pop %v431
        %v433 = vmul.f32 %v317, 1.442695
        %v434 = vpow.pop %v433
        %v435 = vmul.f32 %v318, 1.442695
        %v436 = vpow.pop %v435
        %v437 = vmul.f32 %v319, 1.442695
        %v438 = vpow.pop %v437
        %v439 = vmul.f32 %v320, 1.442695
        %v440 = vpow.pop %v439
        %v441 = vmul.f32 %v321, 1.442695
        %v442 = vpow.pop %v441
        %v443 = vmul.f32 %v322, 1.442695
        %v444 = vpow.pop %v443
        %v445 = vmul.f32 %v323, 1.442695
        %v446 = vpow.pop %v445
        %v447 = vmul.f32 %v324, 1.442695
        %v448 = vpow.pop %v447
        %v449 = vmul.f32 %v325, 1.442695
        %v450 = vpow.pop %v449
        %v451 = vmul.f32 %v326, 1.442695
        %v452 = vpow.pop %v451
        %v453 = vmul.f32 %v327, 1.442695
        %v454 = vpow.pop %v453
        %v455 = vmul.f32 %v328, 1.442695
        %v456 = vpow.pop %v455
        %v457 = vadd.f32 %v330, 1.0
        %v458 = vlog2.pop %v457
        %v459 = vmul.f32 %v458, 0.6931472
        %v460 = vmul.f32 -0.5, %v330
        %v461 = vadd.f32 %v460, 1.0
        %v462 = vmul.f32 %v461, %v330
        %v463 = vand.u32 2147483647, %v330
        %vm464 = vcmp.lt.f32.partialorder %v463, 0.0004427343
        %v465 = vsel %vm464, %v462, %v459
        %v466 = vadd.f32 %v332, 1.0
        %v467 = vlog2.pop %v466
        %v468 = vmul.f32 %v467, 0.6931472
        %v469 = vmul.f32 -0.5, %v332
        %v470 = vadd.f32 %v469, 1.0
        %v471 = vmul.f32 %v470, %v332
        %v472 = vand.u32 2147483647, %v332
        %vm473 = vcmp.lt.f32.partialorder %v472, 0.0004427343
        %v474 = vsel %vm473, %v471, %v468
        %v475 = vadd.f32 %v334, 1.0
        %v476 = vlog2.pop %v475
        %v477 = vmul.f32 %v476, 0.6931472
        %v478 = vmul.f32 -0.5, %v334
        %v479 = vadd.f32 %v478, 1.0
        %v480 = vmul.f32 %v479, %v334
        %v481 = vand.u32 2147483647, %v334
        %vm482 = vcmp.lt.f32.partialorder %v481, 0.0004427343
        %v483 = vsel %vm482, %v480, %v477
        %v484 = vadd.f32 %v336, 1.0
        %v485 = vlog2.pop %v484
        %v486 = vmul.f32 %v485, 0.6931472
        %v487 = vmul.f32 -0.5, %v336
        %v488 = vadd.f32 %v487, 1.0
        %v489 = vmul.f32 %v488, %v336
        %v490 = vand.u32 2147483647, %v336
        %vm491 = vcmp.lt.f32.partialorder %v490, 0.0004427343
        %v492 = vsel %vm491, %v489, %v486
        %v493 = vadd.f32 %v338, 1.0
        %v494 = vlog2.pop %v493
        %v495 = vmul.f32 %v494, 0.6931472
        %v496 = vmul.f32 -0.5, %v338
        %v497 = vadd.f32 %v496, 1.0
        %v498 = vmul.f32 %v497, %v338
        %v499 = vand.u32 2147483647, %v338
        %vm500 = vcmp.lt.f32.partialorder %v499, 0.0004427343
        %v501 = vsel %vm500, %v498, %v495
        %v502 = vadd.f32 %v340, 1.0
        %v503 = vlog2.pop %v502
        %v504 = vmul.f32 %v503, 0.6931472
        %v505 = vmul.f32 -0.5, %v340
        %v506 = vadd.f32 %v505, 1.0
        %v507 = vmul.f32 %v506, %v340
        %v508 = vand.u32 2147483647, %v340
        %vm509 = vcmp.lt.f32.partialorder %v508, 0.0004427343
        %v510 = vsel %vm509, %v507, %v504
        %v511 = vadd.f32 %v342, 1.0
        %v512 = vlog2.pop %v511
        %v513 = vmul.f32 %v512, 0.6931472
        %v514 = vmul.f32 -0.5, %v342
        %v515 = vadd.f32 %v514, 1.0
        %v516 = vmul.f32 %v515, %v342
        %v517 = vand.u32 2147483647, %v342
        %vm518 = vcmp.lt.f32.partialorder %v517, 0.0004427343
        %v519 = vsel %vm518, %v516, %v513
        %v520 = vadd.f32 %v344, 1.0
        %v521 = vlog2.pop %v520
        %v522 = vmul.f32 %v521, 0.6931472
        %v523 = vmul.f32 -0.5, %v344
        %v524 = vadd.f32 %v523, 1.0
        %v525 = vmul.f32 %v524, %v344
        %v526 = vand.u32 2147483647, %v344
        %vm527 = vcmp.lt.f32.partialorder %v526, 0.0004427343
        %v528 = vsel %vm527, %v525, %v522
        %v529 = vadd.f32 %v346, 1.0
        %v530 = vlog2.pop %v529
        %v531 = vmul.f32 %v530, 0.6931472
        %v532 = vmul.f32 -0.5, %v346
        %v533 = vadd.f32 %v532, 1.0
        %v534 = vmul.f32 %v533, %v346
        %v535 = vand.u32 2147483647, %v346
        %vm536 = vcmp.lt.f32.partialorder %v535, 0.0004427343
        %v537 = vsel %vm536, %v534, %v531
        %v538 = vadd.f32 %v348, 1.0
        %v539 = vlog2.pop %v538
        %v540 = vmul.f32 %v539, 0.6931472
        %v541 = vmul.f32 -0.5, %v348
        %v542 = vadd.f32 %v541, 1.0
        %v543 = vmul.f32 %v542, %v348
        %v544 = vand.u32 2147483647, %v348
        %vm545 = vcmp.lt.f32.partialorder %v544, 0.0004427343
        %v546 = vsel %vm545, %v543, %v540
        %v547 = vadd.f32 %v350, 1.0
        %v548 = vlog2.pop %v547
        %v549 = vmul.f32 %v548, 0.6931472
        %v550 = vmul.f32 -0.5, %v350
        %v551 = vadd.f32 %v550, 1.0
        %v552 = vmul.f32 %v551, %v350
        %v553 = vand.u32 2147483647, %v350
        %vm554 = vcmp.lt.f32.partialorder %v553, 0.0004427343
        %v555 = vsel %vm554, %v552, %v549
        %v556 = vadd.f32 %v352, 1.0
        %v557 = vlog2.pop %v556
        %v558 = vmul.f32 %v557, 0.6931472
        %v559 = vmul.f32 -0.5, %v352
        %v560 = vadd.f32 %v559, 1.0
        %v561 = vmul.f32 %v560, %v352
        %v562 = vand.u32 2147483647, %v352
        %vm563 = vcmp.lt.f32.partialorder %v562, 0.0004427343
        %v564 = vsel %vm563, %v561, %v558
        %v565 = vadd.f32 %v354, 1.0
        %v566 = vlog2.pop %v565
        %v567 = vmul.f32 %v566, 0.6931472
        %v568 = vmul.f32 -0.5, %v354
        %v569 = vadd.f32 %v568, 1.0
        %v570 = vmul.f32 %v569, %v354
        %v571 = vand.u32 2147483647, %v354
        %vm572 = vcmp.lt.f32.partialorder %v571, 0.0004427343
        %v573 = vsel %vm572, %v570, %v567
        %v574 = vadd.f32 %v356, 1.0
        %v575 = vlog2.pop %v574
        %v576 = vmul.f32 %v575, 0.6931472
        %v577 = vmul.f32 -0.5, %v356
        %v578 = vadd.f32 %v577, 1.0
        %v579 = vmul.f32 %v578, %v356
        %v580 = vand.u32 2147483647, %v356
        %vm581 = vcmp.lt.f32.partialorder %v580, 0.0004427343
        %v582 = vsel %vm581, %v579, %v576
        %v583 = vadd.f32 %v358, 1.0
        %v584 = vlog2.pop %v583
        %v585 = vmul.f32 %v584, 0.6931472
        %v586 = vmul.f32 -0.5, %v358
        %v587 = vadd.f32 %v586, 1.0
        %v588 = vmul.f32 %v587, %v358
        %v589 = vand.u32 2147483647, %v358
        %vm590 = vcmp.lt.f32.partialorder %v589, 0.0004427343
        %v591 = vsel %vm590, %v588, %v585
        %v592 = vadd.f32 %v360, 1.0
        %v593 = vlog2.pop %v592
        %v594 = vmul.f32 %v593, 0.6931472
        %v595 = vmul.f32 -0.5, %v360
        %v596 = vadd.f32 %v595, 1.0
        %v597 = vmul.f32 %v596, %v360
        %v598 = vand.u32 2147483647, %v360
        %vm599 = vcmp.lt.f32.partialorder %v598, 0.0004427343
        %v600 = vsel %vm599, %v597, %v594
        %v601 = vadd.f32 %v362, 1.0
        %v602 = vlog2.pop %v601
        %v603 = vmul.f32 %v602, 0.6931472
        %v604 = vmul.f32 -0.5, %v362
        %v605 = vadd.f32 %v604, 1.0
        %v606 = vmul.f32 %v605, %v362
        %v607 = vand.u32 2147483647, %v362
        %vm608 = vcmp.lt.f32.partialorder %v607, 0.0004427343
        %v609 = vsel %vm608, %v606, %v603
        %v610 = vadd.f32 %v364, 1.0
        %v611 = vlog2.pop %v610
        %v612 = vmul.f32 %v611, 0.6931472
        %v613 = vmul.f32 -0.5, %v364
        %v614 = vadd.f32 %v613, 1.0
        %v615 = vmul.f32 %v614, %v364
        %v616 = vand.u32 2147483647, %v364
        %vm617 = vcmp.lt.f32.partialorder %v616, 0.0004427343
        %v618 = vsel %vm617, %v615, %v612
        %v619 = vadd.f32 %v366, 1.0
        %v620 = vlog2.pop %v619
        %v621 = vmul.f32 %v620, 0.6931472
        %v622 = vmul.f32 -0.5, %v366
        %v623 = vadd.f32 %v622, 1.0
        %v624 = vmul.f32 %v623, %v366
        %v625 = vand.u32 2147483647, %v366
        %vm626 = vcmp.lt.f32.partialorder %v625, 0.0004427343
        %v627 = vsel %vm626, %v624, %v621
        %v628 = vadd.f32 %v368, 1.0
        %v629 = vlog2.pop %v628
        %v630 = vmul.f32 %v629, 0.6931472
        %v631 = vmul.f32 -0.5, %v368
        %v632 = vadd.f32 %v631, 1.0
        %v633 = vmul.f32 %v632, %v368
        %v634 = vand.u32 2147483647, %v368
        %vm635 = vcmp.lt.f32.partialorder %v634, 0.0004427343
        %v636 = vsel %vm635, %v633, %v630
        %v637 = vadd.f32 %v370, 1.0
        %v638 = vlog2.pop %v637
        %v639 = vmul.f32 %v638, 0.6931472
        %v640 = vmul.f32 -0.5, %v370
        %v641 = vadd.f32 %v640, 1.0
        %v642 = vmul.f32 %v641, %v370
        %v643 = vand.u32 2147483647, %v370
        %vm644 = vcmp.lt.f32.partialorder %v643, 0.0004427343
        %v645 = vsel %vm644, %v642, %v639
        %v646 = vadd.f32 %v372, 1.0
        %v647 = vlog2.pop %v646
        %v648 = vmul.f32 %v647, 0.6931472
        %v649 = vmul.f32 -0.5, %v372
        %v650 = vadd.f32 %v649, 1.0
        %v651 = vmul.f32 %v650, %v372
        %v652 = vand.u32 2147483647, %v372
        %vm653 = vcmp.lt.f32.partialorder %v652, 0.0004427343
        %v654 = vsel %vm653, %v651, %v648
        %v655 = vadd.f32 %v374, 1.0
        %v656 = vlog2.pop %v655
        %v657 = vmul.f32 %v656, 0.6931472
        %v658 = vmul.f32 -0.5, %v374
        %v659 = vadd.f32 %v658, 1.0
        %v660 = vmul.f32 %v659, %v374
        %v661 = vand.u32 2147483647, %v374
        %vm662 = vcmp.lt.f32.partialorder %v661, 0.0004427343
        %v663 = vsel %vm662, %v660, %v657
        %v664 = vadd.f32 %v376, 1.0
        %v665 = vlog2.pop %v664
        %v666 = vmul.f32 %v665, 0.6931472
        %v667 = vmul.f32 -0.5, %v376
        %v668 = vadd.f32 %v667, 1.0
        %v669 = vmul.f32 %v668, %v376
        %v670 = vand.u32 2147483647, %v376
        %vm671 = vcmp.lt.f32.partialorder %v670, 0.0004427343
        %v672 = vsel %vm671, %v669, %v666
        %v673 = vadd.f32 %v378, 1.0
        %v674 = vlog2.pop %v673
        %v675 = vmul.f32 %v674, 0.6931472
        %v676 = vmul.f32 -0.5, %v378
        %v677 = vadd.f32 %v676, 1.0
        %v678 = vmul.f32 %v677, %v378
        %v679 = vand.u32 2147483647, %v378
        %vm680 = vcmp.lt.f32.partialorder %v679, 0.0004427343
        %v681 = vsel %vm680, %v678, %v675
        %v682 = vadd.f32 %v380, 1.0
        %v683 = vlog2.pop %v682
        %v684 = vmul.f32 %v683, 0.6931472
        %v685 = vmul.f32 -0.5, %v380
        %v686 = vadd.f32 %v685, 1.0
        %v687 = vmul.f32 %v686, %v380
        %v688 = vand.u32 2147483647, %v380
        %vm689 = vcmp.lt.f32.partialorder %v688, 0.0004427343
        %v690 = vsel %vm689, %v687, %v684
        %v691 = vadd.f32 %v382, 1.0
        %v692 = vlog2.pop %v691
        %v693 = vmul.f32 %v692, 0.6931472
        %v694 = vmul.f32 -0.5, %v382
        %v695 = vadd.f32 %v694, 1.0
        %v696 = vmul.f32 %v695, %v382
        %v697 = vand.u32 2147483647, %v382
        %vm698 = vcmp.lt.f32.partialorder %v697, 0.0004427343
        %v699 = vsel %vm698, %v696, %v693
        %v700 = vadd.f32 %v384, 1.0
        %v701 = vlog2.pop %v700
        %v702 = vmul.f32 %v701, 0.6931472
        %v703 = vmul.f32 -0.5, %v384
        %v704 = vadd.f32 %v703, 1.0
        %v705 = vmul.f32 %v704, %v384
        %v706 = vand.u32 2147483647, %v384
        %vm707 = vcmp.lt.f32.partialorder %v706, 0.0004427343
        %v708 = vsel %vm707, %v705, %v702
        %v709 = vadd.f32 %v386, 1.0
        %v710 = vlog2.pop %v709
        %v711 = vmul.f32 %v710, 0.6931472
        %v712 = vmul.f32 -0.5, %v386
        %v713 = vadd.f32 %v712, 1.0
        %v714 = vmul.f32 %v713, %v386
        %v715 = vand.u32 2147483647, %v386
        %vm716 = vcmp.lt.f32.partialorder %v715, 0.0004427343
        %v717 = vsel %vm716, %v714, %v711
        %v718 = vadd.f32 %v388, 1.0
        %v719 = vlog2.pop %v718
        %v720 = vmul.f32 %v719, 0.6931472
        %v721 = vmul.f32 -0.5, %v388
        %v722 = vadd.f32 %v721, 1.0
        %v723 = vmul.f32 %v722, %v388
        %v724 = vand.u32 2147483647, %v388
        %vm725 = vcmp.lt.f32.partialorder %v724, 0.0004427343
        %v726 = vsel %vm725, %v723, %v720
        %v727 = vadd.f32 %v390, 1.0
        %v728 = vlog2.pop %v727
        %v729 = vmul.f32 %v728, 0.6931472
        %v730 = vmul.f32 -0.5, %v390
        %v731 = vadd.f32 %v730, 1.0
        %v732 = vmul.f32 %v731, %v390
        %v733 = vand.u32 2147483647, %v390
        %vm734 = vcmp.lt.f32.partialorder %v733, 0.0004427343
        %v735 = vsel %vm734, %v732, %v729
        %v736 = vadd.f32 %v392, 1.0
        %v737 = vlog2.pop %v736
        %v738 = vmul.f32 %v737, 0.6931472
        %v739 = vmul.f32 -0.5, %v392
        %v740 = vadd.f32 %v739, 1.0
        %v741 = vmul.f32 %v740, %v392
        %v742 = vand.u32 2147483647, %v392
        %vm743 = vcmp.lt.f32.partialorder %v742, 0.0004427343
        %v744 = vsel %vm743, %v741, %v738
        %v745 = vadd.f32 %v394, 1.0
        %v746 = vlog2.pop %v745
        %v747 = vmul.f32 %v746, 0.6931472
        %v748 = vmul.f32 -0.5, %v394
        %v749 = vadd.f32 %v748, 1.0
        %v750 = vmul.f32 %v749, %v394
        %v751 = vand.u32 2147483647, %v394
        %vm752 = vcmp.lt.f32.partialorder %v751, 0.0004427343
        %v753 = vsel %vm752, %v750, %v747
        %v754 = vadd.f32 %v396, 1.0
        %v755 = vlog2.pop %v754
        %v756 = vmul.f32 %v755, 0.6931472
        %v757 = vmul.f32 -0.5, %v396
        %v758 = vadd.f32 %v757, 1.0
        %v759 = vmul.f32 %v758, %v396
        %v760 = vand.u32 2147483647, %v396
        %vm761 = vcmp.lt.f32.partialorder %v760, 0.0004427343
        %v762 = vsel %vm761, %v759, %v756
        %v763 = vadd.f32 %v398, 1.0
        %v764 = vlog2.pop %v763
        %v765 = vmul.f32 %v764, 0.6931472
        %v766 = vmul.f32 -0.5, %v398
        %v767 = vadd.f32 %v766, 1.0
        %v768 = vmul.f32 %v767, %v398
        %v769 = vand.u32 2147483647, %v398
        %vm770 = vcmp.lt.f32.partialorder %v769, 0.0004427343
        %v771 = vsel %vm770, %v768, %v765
        %v772 = vadd.f32 %v400, 1.0
        %v773 = vlog2.pop %v772
        %v774 = vmul.f32 %v773, 0.6931472
        %v775 = vmul.f32 -0.5, %v400
        %v776 = vadd.f32 %v775, 1.0
        %v777 = vmul.f32 %v776, %v400
        %v778 = vand.u32 2147483647, %v400
        %vm779 = vcmp.lt.f32.partialorder %v778, 0.0004427343
        %v780 = vsel %vm779, %v777, %v774
        %v781 = vadd.f32 %v402, 1.0
        %v782 = vlog2.pop %v781
        %v783 = vmul.f32 %v782, 0.6931472
        %v784 = vmul.f32 -0.5, %v402
        %v785 = vadd.f32 %v784, 1.0
        %v786 = vmul.f32 %v785, %v402
        %v787 = vand.u32 2147483647, %v402
        %vm788 = vcmp.lt.f32.partialorder %v787, 0.0004427343
        %v789 = vsel %vm788, %v786, %v783
        %v790 = vadd.f32 %v404, 1.0
        %v791 = vlog2.pop %v790
        %v792 = vmul.f32 %v791, 0.6931472
        %v793 = vmul.f32 -0.5, %v404
        %v794 = vadd.f32 %v793, 1.0
        %v795 = vmul.f32 %v794, %v404
        %v796 = vand.u32 2147483647, %v404
        %vm797 = vcmp.lt.f32.partialorder %v796, 0.0004427343
        %v798 = vsel %vm797, %v795, %v792
        %v799 = vadd.f32 %v406, 1.0
        %v800 = vlog2.pop %v799
        %v801 = vmul.f32 %v800, 0.6931472
        %v802 = vmul.f32 -0.5, %v406
        %v803 = vadd.f32 %v802, 1.0
        %v804 = vmul.f32 %v803, %v406
        %v805 = vand.u32 2147483647, %v406
        %vm806 = vcmp.lt.f32.partialorder %v805, 0.0004427343
        %v807 = vsel %vm806, %v804, %v801
        %v808 = vadd.f32 %v408, 1.0
        %v809 = vlog2.pop %v808
        %v810 = vmul.f32 %v809, 0.6931472
        %v811 = vmul.f32 -0.5, %v408
        %v812 = vadd.f32 %v811, 1.0
        %v813 = vmul.f32 %v812, %v408
        %v814 = vand.u32 2147483647, %v408
        %vm815 = vcmp.lt.f32.partialorder %v814, 0.0004427343
        %v816 = vsel %vm815, %v813, %v810
        %v817 = vadd.f32 %v410, 1.0
        %v818 = vlog2.pop %v817
        %v819 = vmul.f32 %v818, 0.6931472
        %v820 = vmul.f32 -0.5, %v410
        %v821 = vadd.f32 %v820, 1.0
        %v822 = vmul.f32 %v821, %v410
        %v823 = vand.u32 2147483647, %v410
        %vm824 = vcmp.lt.f32.partialorder %v823, 0.0004427343
        %v825 = vsel %vm824, %v822, %v819
        %v826 = vadd.f32 %v412, 1.0
        %v827 = vlog2.pop %v826
        %v828 = vmul.f32 %v827, 0.6931472
        %v829 = vmul.f32 -0.5, %v412
        %v830 = vadd.f32 %v829, 1.0
        %v831 = vmul.f32 %v830, %v412
        %v832 = vand.u32 2147483647, %v412
        %vm833 = vcmp.lt.f32.partialorder %v832, 0.0004427343
        %v834 = vsel %vm833, %v831, %v828
        %v835 = vadd.f32 %v414, 1.0
        %v836 = vlog2.pop %v835
        %v837 = vmul.f32 %v836, 0.6931472
        %v838 = vmul.f32 -0.5, %v414
        %v839 = vadd.f32 %v838, 1.0
        %v840 = vmul.f32 %v839, %v414
        %v841 = vand.u32 2147483647, %v414
        %vm842 = vcmp.lt.f32.partialorder %v841, 0.0004427343
        %v843 = vsel %vm842, %v840, %v837
        %v844 = vadd.f32 %v416, 1.0
        %v845 = vlog2.pop %v844
        %v846 = vmul.f32 %v845, 0.6931472
        %v847 = vmul.f32 -0.5, %v416
        %v848 = vadd.f32 %v847, 1.0
        %v849 = vmul.f32 %v848, %v416
        %v850 = vand.u32 2147483647, %v416
        %vm851 = vcmp.lt.f32.partialorder %v850, 0.0004427343
        %v852 = vsel %vm851, %v849, %v846
        %v853 = vadd.f32 %v418, 1.0
        %v854 = vlog2.pop %v853
        %v855 = vmul.f32 %v854, 0.6931472
        %v856 = vmul.f32 -0.5, %v418
        %v857 = vadd.f32 %v856, 1.0
        %v858 = vmul.f32 %v857, %v418
        %v859 = vand.u32 2147483647, %v418
        %vm860 = vcmp.lt.f32.partialorder %v859, 0.0004427343
        %v861 = vsel %vm860, %v858, %v855
        %v862 = vadd.f32 %v420, 1.0
        %v863 = vlog2.pop %v862
        %v864 = vmul.f32 %v863, 0.6931472
        %v865 = vmul.f32 -0.5, %v420
        %v866 = vadd.f32 %v865, 1.0
        %v867 = vmul.f32 %v866, %v420
        %v868 = vand.u32 2147483647, %v420
        %vm869 = vcmp.lt.f32.partialorder %v868, 0.0004427343
        %v870 = vsel %vm869, %v867, %v864
        %v871 = vadd.f32 %v422, 1.0
        %v872 = vlog2.pop %v871
        %v873 = vmul.f32 %v872, 0.6931472
        %v874 = vmul.f32 -0.5, %v422
        %v875 = vadd.f32 %v874, 1.0
        %v876 = vmul.f32 %v875, %v422
        %v877 = vand.u32 2147483647, %v422
        %vm878 = vcmp.lt.f32.partialorder %v877, 0.0004427343
        %v879 = vsel %vm878, %v876, %v873
        %v880 = vadd.f32 %v424, 1.0
        %v881 = vlog2.pop %v880
        %v882 = vmul.f32 %v881, 0.6931472
        %v883 = vmul.f32 -0.5, %v424
        %v884 = vadd.f32 %v883, 1.0
        %v885 = vmul.f32 %v884, %v424
        %v886 = vand.u32 2147483647, %v424
        %vm887 = vcmp.lt.f32.partialorder %v886, 0.0004427343
        %v888 = vsel %vm887, %v885, %v882
        %v889 = vadd.f32 %v426, 1.0
        %v890 = vlog2.pop %v889
        %v891 = vmul.f32 %v890, 0.6931472
        %v892 = vmul.f32 -0.5, %v426
        %v893 = vadd.f32 %v892, 1.0
        %v894 = vmul.f32 %v893, %v426
        %v895 = vand.u32 2147483647, %v426
        %vm896 = vcmp.lt.f32.partialorder %v895, 0.0004427343
        %v897 = vsel %vm896, %v894, %v891
        %v898 = vadd.f32 %v428, 1.0
        %v899 = vlog2.pop %v898
        %v900 = vmul.f32 %v899, 0.6931472
        %v901 = vmul.f32 -0.5, %v428
        %v902 = vadd.f32 %v901, 1.0
        %v903 = vmul.f32 %v902, %v428
        %v904 = vand.u32 2147483647, %v428
        %vm905 = vcmp.lt.f32.partialorder %v904, 0.0004427343
        %v906 = vsel %vm905, %v903, %v900
        %v907 = vadd.f32 %v430, 1.0
        %v908 = vlog2.pop %v907
        %v909 = vmul.f32 %v908, 0.6931472
        %v910 = vmul.f32 -0.5, %v430
        %v911 = vadd.f32 %v910, 1.0
        %v912 = vmul.f32 %v911, %v430
        %v913 = vand.u32 2147483647, %v430
        %vm914 = vcmp.lt.f32.partialorder %v913, 0.0004427343
        %v915 = vsel %vm914, %v912, %v909
        %v916 = vadd.f32 %v432, 1.0
        %v917 = vlog2.pop %v916
        %v918 = vmul.f32 %v917, 0.6931472
        %v919 = vmul.f32 -0.5, %v432
        %v920 = vadd.f32 %v919, 1.0
        %v921 = vmul.f32 %v920, %v432
        %v922 = vand.u32 2147483647, %v432
        %vm923 = vcmp.lt.f32.partialorder %v922, 0.0004427343
        %v924 = vsel %vm923, %v921, %v918
        %v925 = vadd.f32 %v434, 1.0
        %v926 = vlog2.pop %v925
        %v927 = vmul.f32 %v926, 0.6931472
        %v928 = vmul.f32 -0.5, %v434
        %v929 = vadd.f32 %v928, 1.0
        %v930 = vmul.f32 %v929, %v434
        %v931 = vand.u32 2147483647, %v434
        %vm932 = vcmp.lt.f32.partialorder %v931, 0.0004427343
        %v933 = vsel %vm932, %v930, %v927
        %v934 = vadd.f32 %v436, 1.0
        %v935 = vlog2.pop %v934
        %v936 = vmul.f32 %v935, 0.6931472
        %v937 = vmul.f32 -0.5, %v436
        %v938 = vadd.f32 %v937, 1.0
        %v939 = vmul.f32 %v938, %v436
        %v940 = vand.u32 2147483647, %v436
        %vm941 = vcmp.lt.f32.partialorder %v940, 0.0004427343
        %v942 = vsel %vm941, %v939, %v936
        %v943 = vadd.f32 %v438, 1.0
        %v944 = vlog2.pop %v943
        %v945 = vmul.f32 %v944, 0.6931472
        %v946 = vmul.f32 -0.5, %v438
        %v947 = vadd.f32 %v946, 1.0
        %v948 = vmul.f32 %v947, %v438
        %v949 = vand.u32 2147483647, %v438
        %vm950 = vcmp.lt.f32.partialorder %v949, 0.0004427343
        %v951 = vsel %vm950, %v948, %v945
        %v952 = vadd.f32 %v440, 1.0
        %v953 = vlog2.pop %v952
        %v954 = vmul.f32 %v953, 0.6931472
        %v955 = vmul.f32 -0.5, %v440
        %v956 = vadd.f32 %v955, 1.0
        %v957 = vmul.f32 %v956, %v440
        %v958 = vand.u32 2147483647, %v440
        %vm959 = vcmp.lt.f32.partialorder %v958, 0.0004427343
        %v960 = vsel %vm959, %v957, %v954
        %v961 = vadd.f32 %v442, 1.0
        %v962 = vlog2.pop %v961
        %v963 = vmul.f32 %v962, 0.6931472
        %v964 = vmul.f32 -0.5, %v442
        %v965 = vadd.f32 %v964, 1.0
        %v966 = vmul.f32 %v965, %v442
        %v967 = vand.u32 2147483647, %v442
        %vm968 = vcmp.lt.f32.partialorder %v967, 0.0004427343
        %v969 = vsel %vm968, %v966, %v963
        %v970 = vadd.f32 %v444, 1.0
        %v971 = vlog2.pop %v970
        %v972 = vmul.f32 %v971, 0.6931472
        %v973 = vmul.f32 -0.5, %v444
        %v974 = vadd.f32 %v973, 1.0
        %v975 = vmul.f32 %v974, %v444
        %v976 = vand.u32 2147483647, %v444
        %vm977 = vcmp.lt.f32.partialorder %v976, 0.0004427343
        %v978 = vsel %vm977, %v975, %v972
        %v979 = vadd.f32 %v446, 1.0
        %v980 = vlog2.pop %v979
        %v981 = vmul.f32 %v980, 0.6931472
        %v982 = vmul.f32 -0.5, %v446
        %v983 = vadd.f32 %v982, 1.0
        %v984 = vmul.f32 %v983, %v446
        %v985 = vand.u32 2147483647, %v446
        %vm986 = vcmp.lt.f32.partialorder %v985, 0.0004427343
        %v987 = vsel %vm986, %v984, %v981
        %v988 = vadd.f32 %v448, 1.0
        %v989 = vlog2.pop %v988
        %v990 = vmul.f32 %v989, 0.6931472
        %v991 = vmul.f32 -0.5, %v448
        %v992 = vadd.f32 %v991, 1.0
        %v993 = vmul.f32 %v992, %v448
        %v994 = vand.u32 2147483647, %v448
        %vm995 = vcmp.lt.f32.partialorder %v994, 0.0004427343
        %v996 = vsel %vm995, %v993, %v990
        %v997 = vadd.f32 %v450, 1.0
        %v998 = vlog2.pop %v997
        %v999 = vmul.f32 %v998, 0.6931472
        %v1000 = vmul.f32 -0.5, %v450
        %v1001 = vadd.f32 %v1000, 1.0
        %v1002 = vmul.f32 %v1001, %v450
        %v1003 = vand.u32 2147483647, %v450
        %vm1004 = vcmp.lt.f32.partialorder %v1003, 0.0004427343
        %v1005 = vsel %vm1004, %v1002, %v999
        %v1006 = vadd.f32 %v452, 1.0
        %v1007 = vlog2.pop %v1006
        %v1008 = vmul.f32 %v1007, 0.6931472
        %v1009 = vmul.f32 -0.5, %v452
        %v1010 = vadd.f32 %v1009, 1.0
        %v1011 = vmul.f32 %v1010, %v452
        %v1012 = vand.u32 2147483647, %v452
        %vm1013 = vcmp.lt.f32.partialorder %v1012, 0.0004427343
        %v1014 = vsel %vm1013, %v1011, %v1008
        %v1015 = vadd.f32 %v454, 1.0
        %v1016 = vlog2.pop %v1015
        %v1017 = vmul.f32 %v1016, 0.6931472
        %v1018 = vmul.f32 -0.5, %v454
        %v1019 = vadd.f32 %v1018, 1.0
        %v1020 = vmul.f32 %v1019, %v454
        %v1021 = vand.u32 2147483647, %v454
        %vm1022 = vcmp.lt.f32.partialorder %v1021, 0.0004427343
        %v1023 = vsel %vm1022, %v1020, %v1017
        %v1024 = vadd.f32 %v456, 1.0
        %v1025 = vlog2.pop %v1024
        %v1026 = vmul.f32 %v1025, 0.6931472
        %v1027 = vmul.f32 -0.5, %v456
        %v1028 = vadd.f32 %v1027, 1.0
        %v1029 = vmul.f32 %v1028, %v456
        %v1030 = vand.u32 2147483647, %v456
        %vm1031 = vcmp.lt.f32.partialorder %v1030, 0.0004427343
        %v1032 = vsel %vm1031, %v1029, %v1026
        %v1033 = vsel %vm201, %v137, %v465
        %v1034 = vsel %vm202, %v138, %v474
        %v1035 = vsel %vm203, %v139, %v483
        %v1036 = vsel %vm204, %v140, %v492
        %v1037 = vsel %vm205, %v141, %v501
        %v1038 = vsel %vm206, %v142, %v510
        %v1039 = vsel %vm207, %v143, %v519
        %v1040 = vsel %vm208, %v144, %v528
        %v1041 = vsel %vm209, %v145, %v537
        %v1042 = vsel %vm210, %v146, %v546
        %v1043 = vsel %vm211, %v147, %v555
        %v1044 = vsel %vm212, %v148, %v564
        %v1045 = vsel %vm213, %v149, %v573
        %v1046 = vsel %vm214, %v150, %v582
        %v1047 = vsel %vm215, %v151, %v591
        %v1048 = vsel %vm216, %v152, %v600
        %v1049 = vsel %vm217, %v153, %v609
        %v1050 = vsel %vm218, %v154, %v618
        %v1051 = vsel %vm219, %v155, %v627
        %v1052 = vsel %vm220, %v156, %v636
        %v1053 = vsel %vm221, %v157, %v645
        %v1054 = vsel %vm222, %v158, %v654
        %v1055 = vsel %vm223, %v159, %v663
        %v1056 = vsel %vm224, %v160, %v672
        %v1057 = vsel %vm225, %v161, %v681
        %v1058 = vsel %vm226, %v162, %v690
        %v1059 = vsel %vm227, %v163, %v699
        %v1060 = vsel %vm228, %v164, %v708
        %v1061 = vsel %vm229, %v165, %v717
        %v1062 = vsel %vm230, %v166, %v726
        %v1063 = vsel %vm231, %v167, %v735
        %v1064 = vsel %vm232, %v168, %v744
        %v1065 = vsel %vm233, %v169, %v753
        %v1066 = vsel %vm234, %v170, %v762
        %v1067 = vsel %vm235, %v171, %v771
        %v1068 = vsel %vm236, %v172, %v780
        %v1069 = vsel %vm237, %v173, %v789
        %v1070 = vsel %vm238, %v174, %v798
        %v1071 = vsel %vm239, %v175, %v807
        %v1072 = vsel %vm240, %v176, %v816
        %v1073 = vsel %vm241, %v177, %v825
        %v1074 = vsel %vm242, %v178, %v834
        %v1075 = vsel %vm243, %v179, %v843
        %v1076 = vsel %vm244, %v180, %v852
        %v1077 = vsel %vm245, %v181, %v861
        %v1078 = vsel %vm246, %v182, %v870
        %v1079 = vsel %vm247, %v183, %v879
        %v1080 = vsel %vm248, %v184, %v888
        %v1081 = vsel %vm249, %v185, %v897
        %v1082 = vsel %vm250, %v186, %v906
        %v1083 = vsel %vm251, %v187, %v915
        %v1084 = vsel %vm252, %v188, %v924
        %v1085 = vsel %vm253, %v189, %v933
        %v1086 = vsel %vm254, %v190, %v942
        %v1087 = vsel %vm255, %v191, %v951
        %v1088 = vsel %vm256, %v192, %v960
        %v1089 = vsel %vm257, %v193, %v969
        %v1090 = vsel %vm258, %v194, %v978
        %v1091 = vsel %vm259, %v195, %v987
        %v1092 = vsel %vm260, %v196, %v996
        %v1093 = vsel %vm261, %v197, %v1005
        %v1094 = vsel %vm262, %v198, %v1014
        %v1095 = vsel %vm263, %v199, %v1023
        %v1096 = vsel %vm264, %v200, %v1032
        %v1097 = vmax.f32 %v1033, 0.0001
        %v1098 = vmax.f32 %v1034, 0.0001
        %v1099 = vmax.f32 %v1035, 0.0001
        %v1100 = vmax.f32 %v1036, 0.0001
        %v1101 = vmax.f32 %v1037, 0.0001
        %v1102 = vmax.f32 %v1038, 0.0001
        %v1103 = vmax.f32 %v1039, 0.0001
        %v1104 = vmax.f32 %v1040, 0.0001
        %v1105 = vmax.f32 %v1041, 0.0001
        %v1106 = vmax.f32 %v1042, 0.0001
        %v1107 = vmax.f32 %v1043, 0.0001
        %v1108 = vmax.f32 %v1044, 0.0001
        %v1109 = vmax.f32 %v1045, 0.0001
        %v1110 = vmax.f32 %v1046, 0.0001
        %v1111 = vmax.f32 %v1047, 0.0001
        %v1112 = vmax.f32 %v1048, 0.0001
        %v1113 = vmax.f32 %v1049, 0.0001
        %v1114 = vmax.f32 %v1050, 0.0001
        %v1115 = vmax.f32 %v1051, 0.0001
        %v1116 = vmax.f32 %v1052, 0.0001
        %v1117 = vmax.f32 %v1053, 0.0001
        %v1118 = vmax.f32 %v1054, 0.0001
        %v1119 = vmax.f32 %v1055, 0.0001
        %v1120 = vmax.f32 %v1056, 0.0001
        %v1121 = vmax.f32 %v1057, 0.0001
        %v1122 = vmax.f32 %v1058, 0.0001
        %v1123 = vmax.f32 %v1059, 0.0001
        %v1124 = vmax.f32 %v1060, 0.0001
        %v1125 = vmax.f32 %v1061, 0.0001
        %v1126 = vmax.f32 %v1062, 0.0001
        %v1127 = vmax.f32 %v1063, 0.0001
        %v1128 = vmax.f32 %v1064, 0.0001
        %v1129 = vmax.f32 %v1065, 0.0001
        %v1130 = vmax.f32 %v1066, 0.0001
        %v1131 = vmax.f32 %v1067, 0.0001
        %v1132 = vmax.f32 %v1068, 0.0001
        %v1133 = vmax.f32 %v1069, 0.0001
        %v1134 = vmax.f32 %v1070, 0.0001
        %v1135 = vmax.f32 %v1071, 0.0001
        %v1136 = vmax.f32 %v1072, 0.0001
        %v1137 = vmax.f32 %v1073, 0.0001
        %v1138 = vmax.f32 %v1074, 0.0001
        %v1139 = vmax.f32 %v1075, 0.0001
        %v1140 = vmax.f32 %v1076, 0.0001
        %v1141 = vmax.f32 %v1077, 0.0001
        %v1142 = vmax.f32 %v1078, 0.0001
        %v1143 = vmax.f32 %v1079, 0.0001
        %v1144 = vmax.f32 %v1080, 0.0001
        %v1145 = vmax.f32 %v1081, 0.0001
        %v1146 = vmax.f32 %v1082, 0.0001
        %v1147 = vmax.f32 %v1083, 0.0001
        %v1148 = vmax.f32 %v1084, 0.0001
        %v1149 = vmax.f32 %v1085, 0.0001
        %v1150 = vmax.f32 %v1086, 0.0001
        %v1151 = vmax.f32 %v1087, 0.0001
        %v1152 = vmax.f32 %v1088, 0.0001
        %v1153 = vmax.f32 %v1089, 0.0001
        %v1154 = vmax.f32 %v1090, 0.0001
        %v1155 = vmax.f32 %v1091, 0.0001
        %v1156 = vmax.f32 %v1092, 0.0001
        %v1157 = vmax.f32 %v1093, 0.0001
        %v1158 = vmax.f32 %v1094, 0.0001
        %v1159 = vmax.f32 %v1095, 0.0001
        %v1160 = vmax.f32 %v1096, 0.0001
        %v1161 = vmin.f32 %v1097, 10000.0
        %v1162 = vmin.f32 %v1098, 10000.0
        %v1163 = vmin.f32 %v1099, 10000.0
        %v1164 = vmin.f32 %v1100, 10000.0
        %v1165 = vmin.f32 %v1101, 10000.0
        %v1166 = vmin.f32 %v1102, 10000.0
        %v1167 = vmin.f32 %v1103, 10000.0
        %v1168 = vmin.f32 %v1104, 10000.0
        %v1169 = vmin.f32 %v1105, 10000.0
        %v1170 = vmin.f32 %v1106, 10000.0
        %v1171 = vmin.f32 %v1107, 10000.0
        %v1172 = vmin.f32 %v1108, 10000.0
        %v1173 = vmin.f32 %v1109, 10000.0
        %v1174 = vmin.f32 %v1110, 10000.0
        %v1175 = vmin.f32 %v1111, 10000.0
        %v1176 = vmin.f32 %v1112, 10000.0
        %v1177 = vmin.f32 %v1113, 10000.0
        %v1178 = vmin.f32 %v1114, 10000.0
        %v1179 = vmin.f32 %v1115, 10000.0
        %v1180 = vmin.f32 %v1116, 10000.0
        %v1181 = vmin.f32 %v1117, 10000.0
        %v1182 = vmin.f32 %v1118, 10000.0
        %v1183 = vmin.f32 %v1119, 10000.0
        %v1184 = vmin.f32 %v1120, 10000.0
        %v1185 = vmin.f32 %v1121, 10000.0
        %v1186 = vmin.f32 %v1122, 10000.0
        %v1187 = vmin.f32 %v1123, 10000.0
        %v1188 = vmin.f32 %v1124, 10000.0
        %v1189 = vmin.f32 %v1125, 10000.0
        %v1190 = vmin.f32 %v1126, 10000.0
        %v1191 = vmin.f32 %v1127, 10000.0
        %v1192 = vmin.f32 %v1128, 10000.0
        %v1193 = vmin.f32 %v1129, 10000.0
        %v1194 = vmin.f32 %v1130, 10000.0
        %v1195 = vmin.f32 %v1131, 10000.0
        %v1196 = vmin.f32 %v1132, 10000.0
        %v1197 = vmin.f32 %v1133, 10000.0
        %v1198 = vmin.f32 %v1134, 10000.0
        %v1199 = vmin.f32 %v1135, 10000.0
        %v1200 = vmin.f32 %v1136, 10000.0
        %v1201 = vmin.f32 %v1137, 10000.0
        %v1202 = vmin.f32 %v1138, 10000.0
        %v1203 = vmin.f32 %v1139, 10000.0
        %v1204 = vmin.f32 %v1140, 10000.0
        %v1205 = vmin.f32 %v1141, 10000.0
        %v1206 = vmin.f32 %v1142, 10000.0
        %v1207 = vmin.f32 %v1143, 10000.0
        %v1208 = vmin.f32 %v1144, 10000.0
        %v1209 = vmin.f32 %v1145, 10000.0
        %v1210 = vmin.f32 %v1146, 10000.0
        %v1211 = vmin.f32 %v1147, 10000.0
        %v1212 = vmin.f32 %v1148, 10000.0
        %v1213 = vmin.f32 %v1149, 10000.0
        %v1214 = vmin.f32 %v1150, 10000.0
        %v1215 = vmin.f32 %v1151, 10000.0
        %v1216 = vmin.f32 %v1152, 10000.0
        %v1217 = vmin.f32 %v1153, 10000.0
        %v1218 = vmin.f32 %v1154, 10000.0
        %v1219 = vmin.f32 %v1155, 10000.0
        %v1220 = vmin.f32 %v1156, 10000.0
        %v1221 = vmin.f32 %v1157, 10000.0
        %v1222 = vmin.f32 %v1158, 10000.0
        %v1223 = vmin.f32 %v1159, 10000.0
        %v1224 = vmin.f32 %v1160, 10000.0
        %1225 = vst [vmem:[%s134] sm:$0xff] %v1161
        %1226 = vst [vmem:[%s134 + $0x8] sm:$0xff] %v1162
        %1227 = vst [vmem:[%s134 + $0x10] sm:$0xff] %v1163
        %1228 = vst [vmem:[%s134 + $0x18] sm:$0xff] %v1164
        %1229 = vst [vmem:[%s134 + $0x20] sm:$0xff] %v1165
        %1230 = vst [vmem:[%s134 + $0x28] sm:$0xff] %v1166
        %1231 = vst [vmem:[%s134 + $0x30] sm:$0xff] %v1167
        %1232 = vst [vmem:[%s134 + $0x38] sm:$0xff] %v1168
        %1233 = vst [vmem:[%s134 + $0x40] sm:$0xff] %v1169
        %1234 = vst [vmem:[%s134 + $0x48] sm:$0xff] %v1170
        %1235 = vst [vmem:[%s134 + $0x50] sm:$0xff] %v1171
        %1236 = vst [vmem:[%s134 + $0x58] sm:$0xff] %v1172
        %1237 = vst [vmem:[%s134 + $0x60] sm:$0xff] %v1173
        %1238 = vst [vmem:[%s134 + $0x68] sm:$0xff] %v1174
        %1239 = vst [vmem:[%s134 + $0x70] sm:$0xff] %v1175
        %1240 = vst [vmem:[%s134 + $0x78] sm:$0xff] %v1176
        %1241 = vst [vmem:[%s134 + $0x80] sm:$0xff] %v1177
        %1242 = vst [vmem:[%s134 + $0x88] sm:$0xff] %v1178
        %1243 = vst [vmem:[%s134 + $0x90] sm:$0xff] %v1179
        %1244 = vst [vmem:[%s134 + $0x98] sm:$0xff] %v1180
        %1245 = vst [vmem:[%s134 + $0xa0] sm:$0xff] %v1181
        %1246 = vst [vmem:[%s134 + $0xa8] sm:$0xff] %v1182
        %1247 = vst [vmem:[%s134 + $0xb0] sm:$0xff] %v1183
        %1248 = vst [vmem:[%s134 + $0xb8] sm:$0xff] %v1184
        %1249 = vst [vmem:[%s134 + $0xc0] sm:$0xff] %v1185
        %1250 = vst [vmem:[%s134 + $0xc8] sm:$0xff] %v1186
        %1251 = vst [vmem:[%s134 + $0xd0] sm:$0xff] %v1187
        %1252 = vst [vmem:[%s134 + $0xd8] sm:$0xff] %v1188
        %1253 = vst [vmem:[%s134 + $0xe0] sm:$0xff] %v1189
        %1254 = vst [vmem:[%s134 + $0xe8] sm:$0xff] %v1190
        %1255 = vst [vmem:[%s134 + $0xf0] sm:$0xff] %v1191
        %1256 = vst [vmem:[%s134 + $0xf8] sm:$0xff] %v1192
        %1257 = vst [vmem:[%s134 + $0x100] sm:$0xff] %v1193
        %1258 = vst [vmem:[%s134 + $0x108] sm:$0xff] %v1194
        %1259 = vst [vmem:[%s134 + $0x110] sm:$0xff] %v1195
        %1260 = vst [vmem:[%s134 + $0x118] sm:$0xff] %v1196
        %1261 = vst [vmem:[%s134 + $0x120] sm:$0xff] %v1197
        %1262 = vst [vmem:[%s134 + $0x128] sm:$0xff] %v1198
        %1263 = vst [vmem:[%s134 + $0x130] sm:$0xff] %v1199
        %1264 = vst [vmem:[%s134 + $0x138] sm:$0xff] %v1200
        %1265 = vst [vmem:[%s134 + $0x140] sm:$0xff] %v1201
        %1266 = vst [vmem:[%s134 + $0x148] sm:$0xff] %v1202
        %1267 = vst [vmem:[%s134 + $0x150] sm:$0xff] %v1203
        %1268 = vst [vmem:[%s134 + $0x158] sm:$0xff] %v1204
        %1269 = vst [vmem:[%s134 + $0x160] sm:$0xff] %v1205
        %1270 = vst [vmem:[%s134 + $0x168] sm:$0xff] %v1206
        %1271 = vst [vmem:[%s134 + $0x170] sm:$0xff] %v1207
        %1272 = vst [vmem:[%s134 + $0x178] sm:$0xff] %v1208
        %1273 = vst [vmem:[%s134 + $0x180] sm:$0xff] %v1209
        %1274 = vst [vmem:[%s134 + $0x188] sm:$0xff] %v1210
        %1275 = vst [vmem:[%s134 + $0x190] sm:$0xff] %v1211
        %1276 = vst [vmem:[%s134 + $0x198] sm:$0xff] %v1212
        %1277 = vst [vmem:[%s134 + $0x1a0] sm:$0xff] %v1213
        %1278 = vst [vmem:[%s134 + $0x1a8] sm:$0xff] %v1214
        %1279 = vst [vmem:[%s134 + $0x1b0] sm:$0xff] %v1215
        %1280 = vst [vmem:[%s134 + $0x1b8] sm:$0xff] %v1216
        %1281 = vst [vmem:[%s134 + $0x1c0] sm:$0xff] %v1217
        %1282 = vst [vmem:[%s134 + $0x1c8] sm:$0xff] %v1218
        %1283 = vst [vmem:[%s134 + $0x1d0] sm:$0xff] %v1219
        %1284 = vst [vmem:[%s134 + $0x1d8] sm:$0xff] %v1220
        %1285 = vst [vmem:[%s134 + $0x1e0] sm:$0xff] %v1221
        %1286 = vst [vmem:[%s134 + $0x1e8] sm:$0xff] %v1222
        %1287 = vst [vmem:[%s134 + $0x1f0] sm:$0xff] %v1223
        %1288 = vst [vmem:[%s134 + $0x1f8] sm:$0xff] %v1224
        %s1289 = sand.u32 %s52, 1
        %s1290 = scalar_lea.sflag [#allocation4], %s1289
        %s1291 = sand.u32 %s52, 1
        %s1292 = smul.addr %s1291, 512
        %s1293 = scalar_lea.vmem [#allocation5], %s1292
        // Predicated region
        $region29: #{tpu_custom_call.1} parent=23 // pred_check
          %p1294 = pneg %p62
        $region30: #{tpu_custom_call.1} parent=23 // pred_check_branch
          %1296 = sbr.rel (%p1294) target = $region32
        $region31: #{tpu_custom_call.1} parent=23 // pred_region
          %s1297 = smul.u32 64, %s18
          %s1299 = ssub.s32 8192, 8192
          %1300 = vsyncadd %s1290, %s1299
          %s1301 = smul.addr %s1297, 128
          %s1302 = scalar_lea.hbm %s1, %s1301
          %s1303 = sshll.u32 %s1293, 4
          %s1304 = int_to_ptr.vmem [resolvable:$true] %s1303
          %1309 = dma.vmem_to_hbm [thread:$0]  %s1304, 8192, %s1302, %s1290, 128, 128, 8
        $region32: #{tpu_custom_call.1} parent=23 // pred_fallthru
          _
      $region24: #{tpu_custom_call.1} parent=5 // pred_fallthru
        _
      %p1310 = scmp.le.s32.totalorder 2, %s13
      // Predicated region
      $region33: #{tpu_custom_call.1} parent=5 // pred_check
        %p1311 = pneg %p1310
      $region34: #{tpu_custom_call.1} parent=5 // pred_check_branch
        %1313 = sbr.rel (%p1311) target = $region36
      $region35: #{tpu_custom_call.1} parent=5 // pred_region
        %s1314 = ssub.s32 %s13, 2
        // Predicated region
        $region37: #{tpu_custom_call.1} parent=35 // pred_check
          %p1315 = pneg %p68
        $region38: #{tpu_custom_call.1} parent=35 // pred_check_branch
          %1317 = sbr.rel (%p1315) target = $region40
        $region39: #{tpu_custom_call.1} parent=35 // pred_region
          %s1318 = sand.u32 %s53, 1
          %s1319 = scalar_lea.sflag [#allocation4], %s1318
          %s1320 = sand.u32 %s53, 1
          %s1321 = smul.addr %s1320, 512
          %s1322 = scalar_lea.vmem [#allocation5], %s1321
          %1323 = dma.done %s1319, 8192
        $region40: #{tpu_custom_call.1} parent=35 // pred_fallthru
          _
      $region36: #{tpu_custom_call.1} parent=5 // pred_fallthru
        _
    $region6: #{tpu_custom_call.1} parent=1 // loop_footer
      %s17 = sadd.s32 1, %s13
    $region7: #{tpu_custom_call.1} parent=1 // loop_footer_branch
      %12 = sbr.rel target = $region3
    $region8: #{tpu_custom_call.1} parent=1 // loop_exit
      _
    %1324 = vsyncpa [#allocation3], 1
    %s1325 = scalar_lea.sflag [#allocation3], 1
    %1326 = vsyncpa %s1325, 1
    %1327 = vsyncpa [#allocation4], 1
    %s1328 = scalar_lea.sflag [#allocation4], 1
    %1329 = vsyncpa %s1328, 1

</llo_original>
